<compile_context>
chip_gen: v7x
topology: tpu7x:2x2x1
jax: 0.10.0
libtpu: 0.0.40
codegen_flags: <defaults>
</compile_context>

<pallas_src>
import functools

import jax
import jax.numpy as jnp
from jax.experimental import pallas as pl
from jax.experimental.pallas import tpu as pltpu

EPS = 1e-5  # nn.BatchNorm2d default eps


# ---------------------------------------------------------------------------
# Fused kernel: per-branch 1x1 conv (optionally preceded by ReLU) + training-
# mode BatchNorm, written slab-by-slab into the (C_out, B*S) output.
# ---------------------------------------------------------------------------
def _fr_conv1x1_bn_kernel(*refs, offsets, apply_relu):
    # refs = (x_0..x_{nb-1}, w_0..w_{nb-1}, g, bt, o)
    #   x_i : (C_in, N)        activations for branch i, N = B*Ho*Wo (lanes)
    #   w_i : (C_out_i, C_in)  1x1 conv weights for branch i
    #   g   : (C_out, 1)       BN gamma (ones when affine=False)
    #   bt  : (C_out, 1)       BN beta  (zeros when affine=False)
    #   o   : (C_out, N)       normalized output
    nb = len(offsets) - 1
    x_refs = refs[:nb]
    w_refs = refs[nb:2 * nb]
    g_ref, bt_ref, o_ref = refs[2 * nb:2 * nb + 3]

    n = o_ref.shape[1]
    inv_n = 1.0 / float(n)
    g = g_ref[...]          # hoisted: loaded once, sliced per branch
    bt = bt_ref[...]

    for i in range(nb):
        lo, hi = offsets[i], offsets[i + 1]
        x = x_refs[i][...]
        if apply_relu:
            x = jnp.maximum(x, 0.0)                       # fused ReLU (VPU)
        # One MXU push per branch; f32 accumulation.
        y = jnp.dot(w_refs[i][...], x, preferred_element_type=jnp.float32)
        # BN batch stats fused on the still-in-vreg result (lane reduce on XLU).
        mean = jnp.sum(y, axis=1, keepdims=True) * inv_n
        ex2 = jnp.sum(y * y, axis=1, keepdims=True) * inv_n
        var = jnp.maximum(ex2 - mean * mean, 0.0)         # biased batch variance
        scale = jax.lax.rsqrt(var + EPS) * g[lo:hi]
        shift = bt[lo:hi] - mean * scale
        # Channel slabs land at sublane-aligned offsets (C_out//2 multiple of 8
        # in practice); lane width N is a multiple of 128 -> unmasked stores.
        o_ref[lo:hi, :] = y * scale + shift


def _fused_call(xs, ws, g, bt, apply_relu):
    c_in, n = xs[0].shape
    c_outs = [w.shape[0] for w in ws]
    c_out = sum(c_outs)
    offsets = [0]
    for c in c_outs:
        offsets.append(offsets[-1] + c)
    kernel = functools.partial(_fr_conv1x1_bn_kernel,
                               offsets=tuple(offsets), apply_relu=apply_relu)
    in_specs = (
        [pl.BlockSpec(x.shape, lambda i: (0, 0)) for x in xs]
        + [pl.BlockSpec(w.shape, lambda i: (0, 0)) for w in ws]
        + [pl.BlockSpec((c_out, 1), lambda i: (0, 0)),
           pl.BlockSpec((c_out, 1), lambda i: (0, 0))]
    )
    return pl.pallas_call(
        kernel,
        out_shape=jax.ShapeDtypeStruct((c_out, n), jnp.float32),
        grid_spec=pltpu.PrefetchScalarGridSpec(
            num_scalar_prefetch=0,
            grid=(1,),  # whole working set fits in VMEM -> one fused step
            in_specs=in_specs,
            out_specs=pl.BlockSpec((c_out, n), lambda i: (0, 0)),
        ),
        compiler_params=pltpu.CompilerParams(
            dimension_semantics=("arbitrary",),
            vmem_limit_bytes=32 * 1024 * 1024,  # explicit budget (v7x-safe)
        ),
    )(*xs, *ws, g, bt)


# ---------------------------------------------------------------------------
# FactorizedReduce.forward
#   stride==2: relu -> [conv0(x), conv1(shifted x)] channel-concat -> BN
#   stride==1: conv -> BN
# ---------------------------------------------------------------------------
def factorized_reduce_forward(x, conv_ws, conv_bs, gamma, beta, stride):
    """x: (B, C_in, H, W) NCHW. conv_ws: 1x1 weights in OIHW (two for stride 2,
    one for stride 1). conv_bs: matching biases or None (dropped: a per-channel
    constant cancels exactly under training-mode BN). gamma/beta: BN affine
    params or None. Returns NCHW output matching the PyTorch module."""
    b, c_in, h, w = x.shape
    x = x.astype(jnp.float32)
    del conv_bs  # cancels in training-mode BatchNorm (batch statistics)

    if stride == 2:
        # TODO(synk): odd H/W would hit the module's bottom/right zero pad; even
        # spatial (the standard reduce-cell case) is assumed here.
        assert h % 2 == 0 and w % 2 == 0
        ho, wo = h // 2, w // 2
        s = ho * wo
        # stride-2 "im2col" in the wrapper: even-grid and odd-grid samples, with
        # batch folded into the lane axis -> kernel sees (C_in, B*S).
        xe = jnp.transpose(x[:, :, 0::2, 0::2], (1, 0, 2, 3)).reshape(c_in, b * s)
        xo = jnp.transpose(x[:, :, 1::2, 1::2], (1, 0, 2, 3)).reshape(c_in, b * s)
        xs = [xe, xo]
        ws = [w_.reshape(-1, c_in).astype(jnp.float32) for w_ in conv_ws]
        apply_relu = True
    elif stride == 1:
        ho, wo = h, w
        s = h * w
        xs = [jnp.transpose(x.reshape(b, c_in, s), (1, 0, 2)).reshape(c_in, b * s)]
        ws = [conv_ws[0].reshape(-1, c_in).astype(jnp.float32)]
        apply_relu = False
    else:
        raise ValueError(f"Invalid stride: {stride}")

    c_out = sum(w_.shape[0] for w_ in ws)
    g = gamma if gamma is not None else jnp.ones((c_out,), jnp.float32)
    bt = beta if beta is not None else jnp.zeros((c_out,), jnp.float32)

    out = _fused_call(xs, ws,
                      g.astype(jnp.float32).reshape(c_out, 1),
                      bt.astype(jnp.float32).reshape(c_out, 1),
                      apply_relu)
    # (C_out, B*S) -> (B, C_out, Ho, Wo)
    return jnp.transpose(out.reshape(c_out, b, ho, wo), (1, 0, 2, 3))


# ---------------------------------------------------------------------------
# Pure-JAX reference for verification (applies conv bias explicitly).
# ---------------------------------------------------------------------------
def factorized_reduce_reference(x, conv_ws, conv_bs, gamma, beta, stride):
    x = x.astype(jnp.float32)

    def conv1x1(inp, w, bias, st):
        out = jax.lax.conv_general_dilated(
            inp, w.astype(jnp.float32), window_strides=(st, st), padding="VALID",
            dimension_numbers=("NCHW", "OIHW", "NCHW"),
            precision=jax.lax.Precision.HIGHEST)
        if bias is not None:
            out = out + bias.reshape(1, -1, 1, 1)
        return out

    if stride == 2:
        xr = jax.nn.relu(x)
        y0 = conv1x1(xr, conv_ws[0], conv_bs[0], 2)
        xp = jnp.pad(xr, ((0, 0), (0, 0), (0, 1), (0, 1)))[:, :, 1:, 1:]
        y1 = conv1x1(xp, conv_ws[1], conv_bs[1], 2)
        y = jnp.concatenate([y0, y1], axis=1)
    else:
        y = conv1x1(x, conv_ws[0], conv_bs[0], 1)

    mean = jnp.mean(y, axis=(0, 2, 3), keepdims=True)
    var = jnp.mean((y - mean) ** 2, axis=(0, 2, 3), keepdims=True)
    out = (y - mean) / jnp.sqrt(var + EPS)
    if gamma is not None:
        out = out * gamma.reshape(1, -1, 1, 1)
    if beta is not None:
        out = out + beta.reshape(1, -1, 1, 1)
    return out


if __name__ == "__main__":
    B, C_IN, H, W = 2, 8, 16, 16
    C_OUT = 16

    key = jax.random.PRNGKey(0)
    k1, k2, k3, k4, k5, k6, k7, k8 = jax.random.split(key, 8)
    x = jax.random.normal(k1, (B, C_IN, H, W), dtype=jnp.float32)
    c1, c2 = C_OUT // 2, C_OUT - C_OUT // 2
    w0 = 0.2 * jax.random.normal(k2, (c1, C_IN, 1, 1), dtype=jnp.float32)
    w1 = 0.2 * jax.random.normal(k3, (c2, C_IN, 1, 1), dtype=jnp.float32)
    gamma = 1.0 + 0.1 * jax.random.normal(k4, (C_OUT,), dtype=jnp.float32)
    beta = 0.1 * jax.random.normal(k5, (C_OUT,), dtype=jnp.float32)

    # stride == 2, affine=True (no conv bias, BN has gamma/beta).
    out2 = factorized_reduce_forward(x, [w0, w1], [None, None], gamma, beta, stride=2)
    out2 = jax.block_until_ready(out2)
    ref2 = factorized_reduce_reference(x, [w0, w1], [None, None], gamma, beta, stride=2)
    assert out2.shape == (B, C_OUT, H // 2, W // 2)
    assert jnp.allclose(out2, ref2, atol=1e-4, rtol=1e-4)

    # stride == 2, affine=False (conv bias present; must cancel under batch-stat BN).
    b0 = 0.3 * jax.random.normal(k7, (c1,), dtype=jnp.float32)
    b1 = 0.3 * jax.random.normal(k8, (c2,), dtype=jnp.float32)
    out3 = factorized_reduce_forward(x, [w0, w1], [b0, b1], None, None, stride=2)
    out3 = jax.block_until_ready(out3)
    ref3 = factorized_reduce_reference(x, [w0, w1], [b0, b1], None, None, stride=2)
    assert jnp.allclose(out3, ref3, atol=1e-4, rtol=1e-4)

    # stride == 1 (no relu, single 1x1 conv).
    ws1 = 0.2 * jax.random.normal(k6, (C_OUT, C_IN, 1, 1), dtype=jnp.float32)
    out1 = factorized_reduce_forward(x, [ws1], [None], gamma, beta, stride=1)
    out1 = jax.block_until_ready(out1)
    ref1 = factorized_reduce_reference(x, [ws1], [None], gamma, beta, stride=1)
    assert out1.shape == (B, C_OUT, H, W)
    assert jnp.allclose(out1, ref1, atol=1e-4, rtol=1e-4)

    print("KERNEL_OK")
</pallas_src>

<mosaic_0001>
module attributes {stable_mosaic.version = 11 : i64} {
  func.func @_fr_conv1x1_bn_kernel(%arg0: i32, %arg1: memref<8x128xf32, #tpu.memory_space<vmem>>, %arg2: memref<8x128xf32, #tpu.memory_space<vmem>>, %arg3: memref<8x8xf32, #tpu.memory_space<vmem>>, %arg4: memref<8x8xf32, #tpu.memory_space<vmem>>, %arg5: memref<16x1xf32, #tpu.memory_space<vmem>>, %arg6: memref<16x1xf32, #tpu.memory_space<vmem>>, %arg7: memref<16x128xf32, #tpu.memory_space<vmem>>) attributes {dimension_semantics = [#tpu.dimension_semantics<arbitrary>], iteration_bounds = array<i64: 1>, scalar_prefetch = 0 : i64, scratch_operands = 0 : i64, tpu.core_type = #tpu.core_type<tc>, window_params = [{pipeline_mode = #tpu.pipeline_mode<synchronous>, transform_indices = @transform_0, window_bounds = array<i64: 8, 128>}, {pipeline_mode = #tpu.pipeline_mode<synchronous>, transform_indices = @transform_1, window_bounds = array<i64: 8, 128>}, {pipeline_mode = #tpu.pipeline_mode<synchronous>, transform_indices = @transform_2, window_bounds = array<i64: 8, 8>}, {pipeline_mode = #tpu.pipeline_mode<synchronous>, transform_indices = @transform_3, window_bounds = array<i64: 8, 8>}, {pipeline_mode = #tpu.pipeline_mode<synchronous>, transform_indices = @transform_4, window_bounds = array<i64: 16, 1>}, {pipeline_mode = #tpu.pipeline_mode<synchronous>, transform_indices = @transform_5, window_bounds = array<i64: 16, 1>}, {pipeline_mode = #tpu.pipeline_mode<synchronous>, transform_indices = @transform_6, window_bounds = array<i64: 16, 128>}]} {
    %c0 = arith.constant 0 : index
    %c0_0 = arith.constant 0 : index
    %0 = vector.load %arg5[%c0, %c0_0] : memref<16x1xf32, #tpu.memory_space<vmem>>, vector<16x1xf32>
    %c0_1 = arith.constant 0 : index
    %c0_2 = arith.constant 0 : index
    %1 = vector.load %arg6[%c0_1, %c0_2] : memref<16x1xf32, #tpu.memory_space<vmem>>, vector<16x1xf32>
    %c0_3 = arith.constant 0 : index
    %c0_4 = arith.constant 0 : index
    %2 = vector.load %arg1[%c0_3, %c0_4] : memref<8x128xf32, #tpu.memory_space<vmem>>, vector<8x128xf32>
    %cst = arith.constant 0.000000e+00 : f32
    %3 = vector.broadcast %cst : f32 to vector<8x128xf32>
    %4 = arith.maximumf %2, %3 : vector<8x128xf32>
    %c0_5 = arith.constant 0 : index
    %c0_6 = arith.constant 0 : index
    %5 = vector.load %arg3[%c0_5, %c0_6] : memref<8x8xf32, #tpu.memory_space<vmem>>, vector<8x8xf32>
    %cst_7 = arith.constant dense<0.000000e+00> : vector<8x128xf32>
    %6 = tpu.matmul %5, %4, %cst_7 {dimension_numbers = #tpu.dot_dimension_numbers<[1], [0], [0], [1], [0, 0, 1, 1], [], []>} : vector<8x8xf32>, vector<8x128xf32>, vector<8x128xf32> -> vector<8x128xf32>
    %cst_8 = arith.constant dense<0.000000e+00> : vector<8xf32>
    %7 = vector.multi_reduction <add>, %6, %cst_8 [1] : vector<8x128xf32> to vector<8xf32>
    %8 = vector.shape_cast %7 : vector<8xf32> to vector<8x1xf32>
    %cst_9 = arith.constant 7.812500e-03 : f32
    %9 = vector.broadcast %cst_9 : f32 to vector<8x1xf32>
    %10 = arith.mulf %8, %9 : vector<8x1xf32>
    %11 = arith.mulf %6, %6 : vector<8x128xf32>
    %cst_10 = arith.constant dense<0.000000e+00> : vector<8xf32>
    %12 = vector.multi_reduction <add>, %11, %cst_10 [1] : vector<8x128xf32> to vector<8xf32>
    %13 = vector.shape_cast %12 : vector<8xf32> to vector<8x1xf32>
    %cst_11 = arith.constant 7.812500e-03 : f32
    %14 = vector.broadcast %cst_11 : f32 to vector<8x1xf32>
    %15 = arith.mulf %13, %14 : vector<8x1xf32>
    %16 = arith.mulf %10, %10 : vector<8x1xf32>
    %17 = arith.subf %15, %16 : vector<8x1xf32>
    %cst_12 = arith.constant 0.000000e+00 : f32
    %18 = vector.broadcast %cst_12 : f32 to vector<8x1xf32>
    %19 = arith.maximumf %17, %18 : vector<8x1xf32>
    %cst_13 = arith.constant 9.99999974E-6 : f32
    %20 = vector.broadcast %cst_13 : f32 to vector<8x1xf32>
    %21 = arith.addf %19, %20 : vector<8x1xf32>
    %22 = math.rsqrt %21 : vector<8x1xf32>
    %23 = vector.extract_strided_slice %0 {offsets = [0, 0], sizes = [8, 1], strides = [1, 1]} : vector<16x1xf32> to vector<8x1xf32>
    %24 = arith.mulf %22, %23 : vector<8x1xf32>
    %25 = vector.extract_strided_slice %1 {offsets = [0, 0], sizes = [8, 1], strides = [1, 1]} : vector<16x1xf32> to vector<8x1xf32>
    %26 = arith.mulf %10, %24 : vector<8x1xf32>
    %27 = arith.subf %25, %26 : vector<8x1xf32>
    %28 = vector.broadcast %24 : vector<8x1xf32> to vector<8x128xf32>
    %29 = arith.mulf %6, %28 : vector<8x128xf32>
    %30 = vector.broadcast %27 : vector<8x1xf32> to vector<8x128xf32>
    %31 = arith.addf %29, %30 : vector<8x128xf32>
    %c0_14 = arith.constant 0 : index
    %c0_15 = arith.constant 0 : index
    %32 = vector.load %arg7[%c0_14, %c0_15] : memref<16x128xf32, #tpu.memory_space<vmem>>, vector<8x128xf32>
    tpu.vector_store %arg7[%c0_14, %c0_15], %31 {strides = array<i32>} : memref<16x128xf32, #tpu.memory_space<vmem>>, vector<8x128xf32>,
    %c0_16 = arith.constant 0 : index
    %c0_17 = arith.constant 0 : index
    %33 = vector.load %arg2[%c0_16, %c0_17] : memref<8x128xf32, #tpu.memory_space<vmem>>, vector<8x128xf32>
    %cst_18 = arith.constant 0.000000e+00 : f32
    %34 = vector.broadcast %cst_18 : f32 to vector<8x128xf32>
    %35 = arith.maximumf %33, %34 : vector<8x128xf32>
    %c0_19 = arith.constant 0 : index
    %c0_20 = arith.constant 0 : index
    %36 = vector.load %arg4[%c0_19, %c0_20] : memref<8x8xf32, #tpu.memory_space<vmem>>, vector<8x8xf32>
    %cst_21 = arith.constant dense<0.000000e+00> : vector<8x128xf32>
    %37 = tpu.matmul %36, %35, %cst_21 {dimension_numbers = #tpu.dot_dimension_numbers<[1], [0], [0], [1], [0, 0, 1, 1], [], []>} : vector<8x8xf32>, vector<8x128xf32>, vector<8x128xf32> -> vector<8x128xf32>
    %cst_22 = arith.constant dense<0.000000e+00> : vector<8xf32>
    %38 = vector.multi_reduction <add>, %37, %cst_22 [1] : vector<8x128xf32> to vector<8xf32>
    %39 = vector.shape_cast %38 : vector<8xf32> to vector<8x1xf32>
    %cst_23 = arith.constant 7.812500e-03 : f32
    %40 = vector.broadcast %cst_23 : f32 to vector<8x1xf32>
    %41 = arith.mulf %39, %40 : vector<8x1xf32>
    %42 = arith.mulf %37, %37 : vector<8x128xf32>
    %cst_24 = arith.constant dense<0.000000e+00> : vector<8xf32>
    %43 = vector.multi_reduction <add>, %42, %cst_24 [1] : vector<8x128xf32> to vector<8xf32>
    %44 = vector.shape_cast %43 : vector<8xf32> to vector<8x1xf32>
    %cst_25 = arith.constant 7.812500e-03 : f32
    %45 = vector.broadcast %cst_25 : f32 to vector<8x1xf32>
    %46 = arith.mulf %44, %45 : vector<8x1xf32>
    %47 = arith.mulf %41, %41 : vector<8x1xf32>
    %48 = arith.subf %46, %47 : vector<8x1xf32>
    %cst_26 = arith.constant 0.000000e+00 : f32
    %49 = vector.broadcast %cst_26 : f32 to vector<8x1xf32>
    %50 = arith.maximumf %48, %49 : vector<8x1xf32>
    %cst_27 = arith.constant 9.99999974E-6 : f32
    %51 = vector.broadcast %cst_27 : f32 to vector<8x1xf32>
    %52 = arith.addf %50, %51 : vector<8x1xf32>
    %53 = math.rsqrt %52 : vector<8x1xf32>
    %54 = vector.extract_strided_slice %0 {offsets = [8, 0], sizes = [8, 1], strides = [1, 1]} : vector<16x1xf32> to vector<8x1xf32>
    %55 = arith.mulf %53, %54 : vector<8x1xf32>
    %56 = vector.extract_strided_slice %1 {offsets = [8, 0], sizes = [8, 1], strides = [1, 1]} : vector<16x1xf32> to vector<8x1xf32>
    %57 = arith.mulf %41, %55 : vector<8x1xf32>
    %58 = arith.subf %56, %57 : vector<8x1xf32>
    %59 = vector.broadcast %55 : vector<8x1xf32> to vector<8x128xf32>
    %60 = arith.mulf %37, %59 : vector<8x128xf32>
    %61 = vector.broadcast %58 : vector<8x1xf32> to vector<8x128xf32>
    %62 = arith.addf %60, %61 : vector<8x128xf32>
    %c8 = arith.constant 8 : index
    %c0_28 = arith.constant 0 : index
    %63 = vector.load %arg7[%c8, %c0_28] : memref<16x128xf32, #tpu.memory_space<vmem>>, vector<8x128xf32>
    tpu.vector_store %arg7[%c8, %c0_28], %62 {strides = array<i32>} : memref<16x128xf32, #tpu.memory_space<vmem>>, vector<8x128xf32>,
    return
  }
  func.func @transform_0(%arg0: i32) -> (i32, i32) {
    %c0_i32 = arith.constant 0 : i32
    %c0_i32_0 = arith.constant 0 : i32
    %c0_i32_1 = arith.constant 0 : i32
    return %c0_i32, %c0_i32_0 : i32, i32
  }
  func.func @transform_1(%arg0: i32) -> (i32, i32) {
    %c0_i32 = arith.constant 0 : i32
    %c0_i32_0 = arith.constant 0 : i32
    %c0_i32_1 = arith.constant 0 : i32
    return %c0_i32, %c0_i32_0 : i32, i32
  }
  func.func @transform_2(%arg0: i32) -> (i32, i32) {
    %c0_i32 = arith.constant 0 : i32
    %c0_i32_0 = arith.constant 0 : i32
    %c0_i32_1 = arith.constant 0 : i32
    return %c0_i32, %c0_i32_0 : i32, i32
  }
  func.func @transform_3(%arg0: i32) -> (i32, i32) {
    %c0_i32 = arith.constant 0 : i32
    %c0_i32_0 = arith.constant 0 : i32
    %c0_i32_1 = arith.constant 0 : i32
    return %c0_i32, %c0_i32_0 : i32, i32
  }
  func.func @transform_4(%arg0: i32) -> (i32, i32) {
    %c0_i32 = arith.constant 0 : i32
    %c0_i32_0 = arith.constant 0 : i32
    %c0_i32_1 = arith.constant 0 : i32
    return %c0_i32, %c0_i32_0 : i32, i32
  }
  func.func @transform_5(%arg0: i32) -> (i32, i32) {
    %c0_i32 = arith.constant 0 : i32
    %c0_i32_0 = arith.constant 0 : i32
    %c0_i32_1 = arith.constant 0 : i32
    return %c0_i32, %c0_i32_0 : i32, i32
  }
  func.func @transform_6(%arg0: i32) -> (i32, i32) {
    %c0_i32 = arith.constant 0 : i32
    %c0_i32_0 = arith.constant 0 : i32
    %c0_i32_1 = arith.constant 0 : i32
    return %c0_i32, %c0_i32_0 : i32, i32
  }
}

</mosaic_0001>

<llo_original>
// kernel: tpu_custom_call.1
$region0: #{tpu_custom_call.1}
  #allocation0 [shape = 'u32[]', space=smem, size = 0x4, offset = 0x4, fixed_abs, tag = 'smem constant byte address 0x4 - core index']
  #allocation1 [shape = 'u32[144,128]{1,0:T(1,128)}', space=vmem, size = 0x12000, scoped, tag = 'internal scratch']
  %s0 = inlined_call_operand.vmem [shape: f32[8,128], index: 0, kind: input, shape index: {}]
  %s1 = inlined_call_operand.vmem [shape: f32[8,128], index: 1, kind: input, shape index: {}]
  %s2 = inlined_call_operand.vmem [shape: f32[8,8], index: 2, kind: input, shape index: {}]
  %s3 = inlined_call_operand.vmem [shape: f32[8,8], index: 3, kind: input, shape index: {}]
  %s4 = inlined_call_operand.vmem [shape: f32[16,1], index: 4, kind: input, shape index: {}]
  %s5 = inlined_call_operand.vmem [shape: f32[16,1], index: 5, kind: input, shape index: {}]
  %s6 = inlined_call_operand.hbm [shape: f32[16,128], index: 6, kind: output, shape index: {}]
  %s7 = sld [smem:[#allocation0]]
  $region34: #{tpu_custom_call.1} parent=0
    _
  %s9 = ssub.s32 1, %s7
  %s10 = scalar_select 0, %s9, %s7
  $region1: #{tpu_custom_call.1} parent=0
    #allocation2 [shape = 'u8[8192]{0}', space=vmem, size = 0x2000, scoped, tag = 'output window, operand 0, single buffered']
    #allocation3 [shape = 's32[1]{0}', space=sflag, size = 0x4, scoped, tag = 'scoped memory for tpu_custom_call.1']
    %11 = vsyncpa [#allocation3], 0
    // Predicated region
    $region2: #{tpu_custom_call.1} parent=1 // pred_check
      _
    $region3: #{tpu_custom_call.1} parent=1 // pred_check_branch
      %13 = sbr.rel (0) target = $region5
    $region4: #{tpu_custom_call.1} parent=1 // pred_region
      _
    $region5: #{tpu_custom_call.1} parent=1 // pred_fallthru
      _
    // Predicated region
    $region6: #{tpu_custom_call.1} parent=1 // pred_check
      _
    $region7: #{tpu_custom_call.1} parent=1 // pred_check_branch
      %15 = sbr.rel (0) target = $region9
    $region8: #{tpu_custom_call.1} parent=1 // pred_region
      _
    $region9: #{tpu_custom_call.1} parent=1 // pred_fallthru
      _
    // Predicated region
    $region10: #{tpu_custom_call.1} parent=1 // pred_check
      _
    $region11: #{tpu_custom_call.1} parent=1 // pred_check_branch
      %17 = sbr.rel (0) target = $region13
    $region12: #{tpu_custom_call.1} parent=1 // pred_region
      _
    $region13: #{tpu_custom_call.1} parent=1 // pred_fallthru
      _
    // Predicated region
    $region14: #{tpu_custom_call.1} parent=1 // pred_check
      _
    $region15: #{tpu_custom_call.1} parent=1 // pred_check_branch
      %19 = sbr.rel (0) target = $region17
    $region16: #{tpu_custom_call.1} parent=1 // pred_region
      _
    $region17: #{tpu_custom_call.1} parent=1 // pred_fallthru
      _
    // Predicated region
    $region18: #{tpu_custom_call.1} parent=1 // pred_check
      _
    $region19: #{tpu_custom_call.1} parent=1 // pred_check_branch
      %21 = sbr.rel (0) target = $region21
    $region20: #{tpu_custom_call.1} parent=1 // pred_region
      _
    $region21: #{tpu_custom_call.1} parent=1 // pred_fallthru
      _
    // Predicated region
    $region22: #{tpu_custom_call.1} parent=1 // pred_check
      _
    $region23: #{tpu_custom_call.1} parent=1 // pred_check_branch
      %23 = sbr.rel (0) target = $region25
    $region24: #{tpu_custom_call.1} parent=1 // pred_region
      _
    $region25: #{tpu_custom_call.1} parent=1 // pred_fallthru
      _
    %v24 = vld [vmem:[%s4] sm:$0xff]
    %v25 = vld [vmem:[%s4 + $0x8] sm:$0xff]
    %v26 = vld [vmem:[%s5] sm:$0xff]
    %v27 = vld [vmem:[%s5 + $0x8] sm:$0xff]
    %v28 = vld [vmem:[%s0] sm:$0xff]
    %v29 = vmax.f32 %v28, 0.0
    %v30 = vld [vmem:[%s2] sm:$0xff]
    %vm31 = vcmask 64512
    %v33 = vsel %vm31, %v30, 0
    %35 = vmatprep.subr.mxu0 0.0
    %36 = vmatpush1.msra.mxu0 %v29
    %37 = vmatprep.subr.mxu0 0.0
    %38 = vmatpush1.msra.mxu0 0.0
    %39 = vmatprep.subr.mxu0 0.0
    %40 = vmatpush1.msra.mxu0 0.0
    %41 = vmatprep.subr.mxu0 0.0
    %42 = vmatpush1.msra.mxu0 0.0
    %43 = vmatprep.subr.mxu0 0.0
    %44 = vmatpush1.msra.mxu0 0.0
    %45 = vmatprep.subr.mxu0 0.0
    %46 = vmatpush1.msra.mxu0 0.0
    %47 = vmatprep.subr.mxu0 0.0
    %48 = vmatpush1.msra.mxu0 0.0
    %49 = vmatprep.subr.mxu0 0.0
    %50 = vmatpush1.msra.mxu0 0.0
    %51 = vmatprep.subr.mxu0 0.0
    %52 = vmatpush1.msra.mxu0 0.0
    %53 = vmatprep.subr.mxu0 0.0
    %54 = vmatpush1.msra.mxu0 0.0
    %55 = vmatprep.subr.mxu0 0.0
    %56 = vmatpush1.msra.mxu0 0.0
    %57 = vmatprep.subr.mxu0 0.0
    %58 = vmatpush1.msra.mxu0 0.0
    %59 = vmatprep.subr.mxu0 0.0
    %60 = vmatpush1.msra.mxu0 0.0
    %61 = vmatprep.subr.mxu0 0.0
    %62 = vmatpush1.msra.mxu0 0.0
    %63 = vmatprep.subr.mxu0 0.0
    %64 = vmatpush1.msra.mxu0 0.0
    %65 = vmatprep.subr.mxu0 0.0
    %66 = vmatpush1.msra.mxu0 0.0
    %67 = vmatprep.subr.mxu0 0.0
    %68 = vmatpush1.msra.mxu0 0.0
    %69 = vmatprep.subr.mxu0 0.0
    %70 = vmatpush1.msra.mxu0 0.0
    %71 = vmatprep.subr.mxu0 0.0
    %72 = vmatpush1.msra.mxu0 0.0
    %73 = vmatprep.subr.mxu0 0.0
    %74 = vmatpush1.msra.mxu0 0.0
    %75 = vmatprep.subr.mxu0 0.0
    %76 = vmatpush1.msra.mxu0 0.0
    %77 = vmatprep.subr.mxu0 0.0
    %78 = vmatpush1.msra.mxu0 0.0
    %79 = vmatprep.subr.mxu0 0.0
    %80 = vmatpush1.msra.mxu0 0.0
    %81 = vmatprep.subr.mxu0 0.0
    %82 = vmatpush1.msra.mxu0 0.0
    %83 = vmatprep.subr.mxu0 0.0
    %84 = vmatpush1.msra.mxu0 0.0
    %85 = vmatprep.subr.mxu0 0.0
    %86 = vmatpush1.msra.mxu0 0.0
    %87 = vmatprep.subr.mxu0 0.0
    %88 = vmatpush1.msra.mxu0 0.0
    %89 = vmatprep.subr.mxu0 0.0
    %90 = vmatpush1.msra.mxu0 0.0
    %91 = vmatprep.subr.mxu0 0.0
    %92 = vmatpush1.msra.mxu0 0.0
    %93 = vmatprep.subr.mxu0 0.0
    %94 = vmatpush1.msra.mxu0 0.0
    %95 = vmatprep.subr.mxu0 0.0
    %96 = vmatpush1.msra.mxu0 0.0
    %97 = vmatprep.subr.mxu0 0.0
    %98 = vmatpush1.msra.mxu0 0.0
    %99 = vmatprep.mubr.f32.mxu0 0.0
    %100 = vmatmul.mubr.f32.gmra.mrb[0].mxu0 %v33
    %v101 = vpop.f32.mrb[0].mxu0
    %v102 = vadd.f32 0.0, %v101
    %v103 = vpop.f32.mrb[0].mxu0
    %104 = vdwg.mxu0
    %105 = vadd.xlane.f32.xlu0 %v102
    %v106 = vpop.xlane.xlu0 %105
    %v107 = vmul.f32 %v106, 0.0078125
    %v108 = vmul.f32 %v102, %v102
    %109 = vadd.xlane.f32.xlu0 %v108
    %v110 = vpop.xlane.xlu0 %109
    %v111 = vmul.f32 %v110, 0.0078125
    %v112 = vmul.f32 %v107, %v107
    %v113 = vsub.f32 %v111, %v112
    %v114 = vmax.f32 %v113, 0.0
    %v115 = vadd.f32 %v114, 1e-05
    %v116 = vrsqrt.pop %v115
    %v117 = vmul.f32 %v116, %v24
    %v118 = vmul.f32 %v107, %v117
    %v119 = vsub.f32 %v26, %v118
    %121 = vset.pattern.permute.xlu0 0
    %122 = vperm.xlu0 %121, %v117
    %v123 = vpop.permute.xlu0 %122
    %v125 = vmul.f32 %v102, %v123
    %127 = vset.pattern.permute.xlu0 0
    %128 = vperm.xlu0 %127, %v119
    %v129 = vpop.permute.xlu0 %128
    %v131 = vadd.f32 %v125, %v129
    %132 = vst [vmem:[#allocation2] sm:$0xff] %v131
    %v133 = vld [vmem:[%s1] sm:$0xff]
    %v134 = vmax.f32 %v133, 0.0
    %v135 = vld [vmem:[%s3] sm:$0xff]
    %v137 = vsel %vm31, %v135, 0
    %139 = vmatprep.subr.mxu0 0.0
    %140 = vmatpush1.msra.mxu0 %v134
    %141 = vmatprep.subr.mxu0 0.0
    %142 = vmatpush1.msra.mxu0 0.0
    %143 = vmatprep.subr.mxu0 0.0
    %144 = vmatpush1.msra.mxu0 0.0
    %145 = vmatprep.subr.mxu0 0.0
    %146 = vmatpush1.msra.mxu0 0.0
    %147 = vmatprep.subr.mxu0 0.0
    %148 = vmatpush1.msra.mxu0 0.0
    %149 = vmatprep.subr.mxu0 0.0
    %150 = vmatpush1.msra.mxu0 0.0
    %151 = vmatprep.subr.mxu0 0.0
    %152 = vmatpush1.msra.mxu0 0.0
    %153 = vmatprep.subr.mxu0 0.0
    %154 = vmatpush1.msra.mxu0 0.0
    %155 = vmatprep.subr.mxu0 0.0
    %156 = vmatpush1.msra.mxu0 0.0
    %157 = vmatprep.subr.mxu0 0.0
    %158 = vmatpush1.msra.mxu0 0.0
    %159 = vmatprep.subr.mxu0 0.0
    %160 = vmatpush1.msra.mxu0 0.0
    %161 = vmatprep.subr.mxu0 0.0
    %162 = vmatpush1.msra.mxu0 0.0
    %163 = vmatprep.subr.mxu0 0.0
    %164 = vmatpush1.msra.mxu0 0.0
    %165 = vmatprep.subr.mxu0 0.0
    %166 = vmatpush1.msra.mxu0 0.0
    %167 = vmatprep.subr.mxu0 0.0
    %168 = vmatpush1.msra.mxu0 0.0
    %169 = vmatprep.subr.mxu0 0.0
    %170 = vmatpush1.msra.mxu0 0.0
    %171 = vmatprep.subr.mxu0 0.0
    %172 = vmatpush1.msra.mxu0 0.0
    %173 = vmatprep.subr.mxu0 0.0
    %174 = vmatpush1.msra.mxu0 0.0
    %175 = vmatprep.subr.mxu0 0.0
    %176 = vmatpush1.msra.mxu0 0.0
    %177 = vmatprep.subr.mxu0 0.0
    %178 = vmatpush1.msra.mxu0 0.0
    %179 = vmatprep.subr.mxu0 0.0
    %180 = vmatpush1.msra.mxu0 0.0
    %181 = vmatprep.subr.mxu0 0.0
    %182 = vmatpush1.msra.mxu0 0.0
    %183 = vmatprep.subr.mxu0 0.0
    %184 = vmatpush1.msra.mxu0 0.0
    %185 = vmatprep.subr.mxu0 0.0
    %186 = vmatpush1.msra.mxu0 0.0
    %187 = vmatprep.subr.mxu0 0.0
    %188 = vmatpush1.msra.mxu0 0.0
    %189 = vmatprep.subr.mxu0 0.0
    %190 = vmatpush1.msra.mxu0 0.0
    %191 = vmatprep.subr.mxu0 0.0
    %192 = vmatpush1.msra.mxu0 0.0
    %193 = vmatprep.subr.mxu0 0.0
    %194 = vmatpush1.msra.mxu0 0.0
    %195 = vmatprep.subr.mxu0 0.0
    %196 = vmatpush1.msra.mxu0 0.0
    %197 = vmatprep.subr.mxu0 0.0
    %198 = vmatpush1.msra.mxu0 0.0
    %199 = vmatprep.subr.mxu0 0.0
    %200 = vmatpush1.msra.mxu0 0.0
    %201 = vmatprep.subr.mxu0 0.0
    %202 = vmatpush1.msra.mxu0 0.0
    %203 = vmatprep.mubr.f32.mxu0 0.0
    %204 = vmatmul.mubr.f32.gmra.mrb[0].mxu0 %v137
    %v205 = vpop.f32.mrb[0].mxu0
    %v206 = vadd.f32 0.0, %v205
    %v207 = vpop.f32.mrb[0].mxu0
    %208 = vdwg.mxu0
    %209 = vadd.xlane.f32.xlu0 %v206
    %v210 = vpop.xlane.xlu0 %209
    %v211 = vmul.f32 %v210, 0.0078125
    %v212 = vmul.f32 %v206, %v206
    %213 = vadd.xlane.f32.xlu0 %v212
    %v214 = vpop.xlane.xlu0 %213
    %v215 = vmul.f32 %v214, 0.0078125
    %v216 = vmul.f32 %v211, %v211
    %v217 = vsub.f32 %v215, %v216
    %v218 = vmax.f32 %v217, 0.0
    %v219 = vadd.f32 %v218, 1e-05
    %v220 = vrsqrt.pop %v219
    %v221 = vmul.f32 %v220, %v25
    %v222 = vmul.f32 %v211, %v221
    %v223 = vsub.f32 %v27, %v222
    %225 = vset.pattern.permute.xlu0 0
    %226 = vperm.xlu0 %225, %v221
    %v227 = vpop.permute.xlu0 %226
    %v229 = vmul.f32 %v206, %v227
    %231 = vset.pattern.permute.xlu0 0
    %232 = vperm.xlu0 %231, %v223
    %v233 = vpop.permute.xlu0 %232
    %v235 = vadd.f32 %v229, %v233
    %236 = vst [vmem:[#allocation2 + $0x8] sm:$0xff] %v235
    // Predicated region
    $region26: #{tpu_custom_call.1} parent=1 // pred_check
      _
    $region27: #{tpu_custom_call.1} parent=1 // pred_check_branch
      %238 = sbr.rel (0) target = $region29
    $region28: #{tpu_custom_call.1} parent=1 // pred_region
      %s240 = ssub.s32 256, 256
      %241 = vsyncadd [#allocation3], %s240
      %s242 = sshll.u32 [#allocation2], 4
      %s243 = int_to_ptr.vmem [resolvable:$true] %s242
      %248 = dma.vmem_to_hbm [thread:$0]  %s243, 256, %s6, [#allocation3], 128, 128, 8
    $region29: #{tpu_custom_call.1} parent=1 // pred_fallthru
      _
    // Predicated region
    $region30: #{tpu_custom_call.1} parent=1 // pred_check
      _
    $region31: #{tpu_custom_call.1} parent=1 // pred_check_branch
      %250 = sbr.rel (0) target = $region33
    $region32: #{tpu_custom_call.1} parent=1 // pred_region
      %251 = dma.done [#allocation3], 256
    $region33: #{tpu_custom_call.1} parent=1 // pred_fallthru
      _
    %252 = vsyncpa [#allocation3], 1

</llo_original>
